<compile_context>
chip_gen: v5e
topology: v5e:2x2
jax: 0.10.0
libtpu: 0.0.40
codegen_flags: <defaults>
</compile_context>

<pallas_src>
import jax
import jax.numpy as jnp
from jax.experimental import pallas as pl
from jax.experimental.pallas import tpu as pltpu


# ----------------------------------------------------------------------------
# Fused Pallas kernel: T GRU steps + fusion Linear, weights VMEM-resident.
# ----------------------------------------------------------------------------
def _make_decoder_seq_kernel(H, Hp):
    """H = hidden size, Hp = per-gate lane-padded width (multiple of 128)."""

    def kernel(x_ref, fs_ref, h0_ref,
               w_ih_ref, w_hh_ref, b_ih_ref, b_hh_ref,
               w_f_rnn_ref, w_f_static_ref, b_f_ref,
               rnn_out_ref, logits_ref,
               h_scr):
        t = pl.program_id(0)

        # Initialize the carried hidden state from the input on the first step.
        @pl.when(t == 0)
        def _():
            h_scr[...] = h0_ref[...]

        h = h_scr[...]                                   # (B, H)  f32
        x = x_ref[...]                                   # (B, X)  f32  [embed|ctx]

        # GRU gates: one packed dot per side, gates lane-aligned at 0/Hp/2Hp.
        gi = jnp.dot(x.astype(jnp.bfloat16), w_ih_ref[...],
                     preferred_element_type=jnp.float32) + b_ih_ref[...]
        gh = jnp.dot(h.astype(jnp.bfloat16), w_hh_ref[...],
                     preferred_element_type=jnp.float32) + b_hh_ref[...]

        # PyTorch GRU gate order: r, z, n (each slice starts on a 128-lane tile).
        i_r = gi[:, 0:H]
        i_z = gi[:, Hp:Hp + H]
        i_n = gi[:, 2 * Hp:2 * Hp + H]
        h_r = gh[:, 0:H]
        h_z = gh[:, Hp:Hp + H]
        h_n = gh[:, 2 * Hp:2 * Hp + H]

        r = jax.nn.sigmoid(i_r + h_r)
        z = jax.nn.sigmoid(i_z + h_z)
        n = jnp.tanh(i_n + r * h_n)
        h_new = (1.0 - z) * n + z * h                    # (B, H) f32

        h_scr[...] = h_new                               # carry to next step
        rnn_out_ref[...] = h_new

        # Fusion linear: 2 packed dots (rnn part straight from vregs + static
        # part), f32 accumulation.
        logits = jnp.dot(h_new.astype(jnp.bfloat16), w_f_rnn_ref[...],
                         preferred_element_type=jnp.float32)
        logits = logits + jnp.dot(fs_ref[...].astype(jnp.bfloat16),
                                  w_f_static_ref[...],
                                  preferred_element_type=jnp.float32)
        logits_ref[...] = logits + b_f_ref[...]

    return kernel


# ----------------------------------------------------------------------------
# One-time parameter preparation (transpose, gate lane-padding, bf16 cast).
# ----------------------------------------------------------------------------
def prepare_params(raw, hidden_size, weight_dtype=jnp.bfloat16):
    """raw weights are in PyTorch layout:
         w_ih (3H, X)  w_hh (3H, H)  b_ih (3H,)  b_hh (3H,)   (gate order r,z,n)
         w_fusion (V, F)  b_fusion (V,)
       X = E + sum(ctx dims); F = H + E + CAL + NAME + sum(ctx) + sum(actx).
    """
    H = hidden_size
    Hp = ((H + 127) // 128) * 128          # per-gate lane-aligned width

    w_ih_t = jnp.asarray(raw["w_ih"], jnp.float32).T     # (X, 3H)
    w_hh_t = jnp.asarray(raw["w_hh"], jnp.float32).T     # (H, 3H)

    def pad_gate_cols(w):                  # (K, 3H) -> (K, 3*Hp), gates at 0/Hp/2Hp
        parts = []
        for g in range(3):
            blk = w[:, g * H:(g + 1) * H]
            parts.append(jnp.pad(blk, ((0, 0), (0, Hp - H))))
        return jnp.concatenate(parts, axis=-1)

    def pad_gate_bias(b):                  # (3H,) -> (1, 3*Hp)
        parts = []
        for g in range(3):
            blk = b[g * H:(g + 1) * H]
            parts.append(jnp.pad(blk, (0, Hp - H)))
        return jnp.concatenate(parts).reshape(1, -1)

    w_ih_p = pad_gate_cols(w_ih_t).astype(weight_dtype)
    w_hh_p = pad_gate_cols(w_hh_t).astype(weight_dtype)
    b_ih_p = pad_gate_bias(jnp.asarray(raw["b_ih"], jnp.float32))   # f32 (post-dot add)
    b_hh_p = pad_gate_bias(jnp.asarray(raw["b_hh"], jnp.float32))

    w_f_t = jnp.asarray(raw["w_fusion"], jnp.float32).T             # (F, V)
    w_f_rnn = w_f_t[:H].astype(weight_dtype)                        # (H, V)
    w_f_static = w_f_t[H:].astype(weight_dtype)                     # (F-H, V)
    b_f = jnp.asarray(raw["b_fusion"], jnp.float32).reshape(1, -1)  # (1, V) f32

    return {
        "H": H, "Hp": Hp,
        "w_ih": w_ih_p, "w_hh": w_hh_p, "b_ih": b_ih_p, "b_hh": b_hh_p,
        "w_f_rnn": w_f_rnn, "w_f_static": w_f_static, "b_f": b_f,
    }


# ----------------------------------------------------------------------------
# T-step fused decode (single pallas_call, weights stay in VMEM across steps)
# ----------------------------------------------------------------------------
def decoder_forward_seq(prepared, input_embeds, decoder_hidden, calorie_encoding,
                        name_encoding, contexts, attn_fusion_contexts):
    """input_embeds: (T,B,E); contexts/attn_fusion_contexts: lists of (T,B,*).
    Returns (rnn_outputs (T,B,H), final_hidden (B,H), logits (T,B,V))."""
    contexts = list(contexts)
    attn_fusion_contexts = list(attn_fusion_contexts)
    T, B, _ = input_embeds.shape
    H, Hp = prepared["H"], prepared["Hp"]
    V = prepared["b_f"].shape[-1]

    # Pack GRU x-side input and the "static" fusion inputs once (layout plumbing
    # outside the per-step loop; matches the PyTorch concatenation order).
    x_cat = jnp.concatenate([input_embeds] + contexts, axis=-1)          # (T,B,X)
    cal_b = jnp.broadcast_to(calorie_encoding[None],
                             (T,) + calorie_encoding.shape)
    name_b = jnp.broadcast_to(name_encoding[None],
                              (T,) + name_encoding.shape)
    fusion_static = jnp.concatenate(
        [input_embeds, cal_b, name_b] + contexts + attn_fusion_contexts,
        axis=-1)                                                         # (T,B,F-H)

    X = x_cat.shape[-1]
    Fs = fusion_static.shape[-1]

    kernel = _make_decoder_seq_kernel(H, Hp)

    def resident(arr):   # whole-array block, constant index -> fetched once
        nd = arr.ndim
        return pl.BlockSpec(arr.shape, lambda t, _nd=nd: (0,) * _nd)

    in_specs = [
        pl.BlockSpec((None, B, X), lambda t: (t, 0, 0)),     # per-step GRU input
        pl.BlockSpec((None, B, Fs), lambda t: (t, 0, 0)),    # per-step fusion input
        resident(decoder_hidden),
        resident(prepared["w_ih"]),
        resident(prepared["w_hh"]),
        resident(prepared["b_ih"]),
        resident(prepared["b_hh"]),
        resident(prepared["w_f_rnn"]),
        resident(prepared["w_f_static"]),
        resident(prepared["b_f"]),
    ]
    out_specs = (
        pl.BlockSpec((None, B, H), lambda t: (t, 0, 0)),
        pl.BlockSpec((None, B, V), lambda t: (t, 0, 0)),
    )

    rnn_outputs, logits = pl.pallas_call(
        kernel,
        grid=(T,),
        in_specs=in_specs,
        out_specs=out_specs,
        out_shape=(jax.ShapeDtypeStruct((T, B, H), jnp.float32),
                   jax.ShapeDtypeStruct((T, B, V), jnp.float32)),
        scratch_shapes=[pltpu.VMEM((B, H), jnp.float32)],     # carried hidden state
        compiler_params=pltpu.CompilerParams(
            dimension_semantics=("arbitrary",),               # time is a recurrence
            vmem_limit_bytes=8 * 1024 * 1024),
    )(x_cat, fusion_static, decoder_hidden,
      prepared["w_ih"], prepared["w_hh"], prepared["b_ih"], prepared["b_hh"],
      prepared["w_f_rnn"], prepared["w_f_static"], prepared["b_f"])

    # Single-layer GRU: the last rnn_output IS the new hidden state.
    return rnn_outputs, rnn_outputs[-1], logits


# ----------------------------------------------------------------------------
# Decoder.forward_step equivalent (T = 1 slice of the fused sequence kernel)
# ----------------------------------------------------------------------------
def decoder_forward_step(prepared, input_embed, decoder_hidden, calorie_encoding,
                         name_encoding, context, attn_fusion_context):
    """Returns (rnn_output, new_decoder_hidden, fusion_logits)."""
    rnn_seq, new_hidden, logits_seq = decoder_forward_seq(
        prepared, input_embed[None], decoder_hidden, calorie_encoding,
        name_encoding, [c[None] for c in context],
        [a[None] for a in attn_fusion_context])
    return rnn_seq[0], new_hidden, logits_seq[0]


# ----------------------------------------------------------------------------
# Pure-JAX f32 reference (PyTorch layout, explicit concatenations)
# ----------------------------------------------------------------------------
def decoder_step_ref(raw, input_embed, h, calorie_encoding, name_encoding,
                     context, attn_fusion_context):
    x = jnp.concatenate([input_embed] + list(context), axis=-1)
    gi = x @ raw["w_ih"].T + raw["b_ih"]
    gh = h @ raw["w_hh"].T + raw["b_hh"]
    i_r, i_z, i_n = jnp.split(gi, 3, axis=-1)
    h_r, h_z, h_n = jnp.split(gh, 3, axis=-1)
    r = jax.nn.sigmoid(i_r + h_r)
    z = jax.nn.sigmoid(i_z + h_z)
    n = jnp.tanh(i_n + r * h_n)
    rnn_output = (1.0 - z) * n + z * h
    fusion_in = jnp.concatenate(
        [rnn_output, input_embed, calorie_encoding, name_encoding]
        + list(context) + list(attn_fusion_context), axis=-1)
    logits = fusion_in @ raw["w_fusion"].T + raw["b_fusion"]
    return rnn_output, rnn_output, logits


# ----------------------------------------------------------------------------
# Main
# ----------------------------------------------------------------------------
if __name__ == "__main__":
    # Small, module-consistent sizes.
    B = 8                 # batch
    T = 4                 # decode steps (in-kernel time grid)
    E = 32                # vocab_emb_dim
    H = 64                # hidden_size
    C = 32                # dynamic attention context size
    CAL = 16              # calorie_encoded_size
    NAME = 16             # name_encoded_size
    ACTX = 16             # personalized attention-fusion context size
    V = 128               # attn_fusion_layer output dim (lane-dense)

    X = E + C                             # GRU input size
    F = H + E + CAL + NAME + C + ACTX     # fusion-layer input size

    key = jax.random.PRNGKey(0)
    ks = jax.random.split(key, 12)
    s = 0.1
    # Raw weights in PyTorch layout (GRU gate order r, z, n along the 3H axis).
    raw_params = {
        "w_ih":     s * jax.random.normal(ks[0], (3 * H, X), jnp.float32),
        "w_hh":     s * jax.random.normal(ks[1], (3 * H, H), jnp.float32),
        "b_ih":     s * jax.random.normal(ks[2], (3 * H,), jnp.float32),
        "b_hh":     s * jax.random.normal(ks[3], (3 * H,), jnp.float32),
        "w_fusion": s * jax.random.normal(ks[4], (V, F), jnp.float32),
        "b_fusion": s * jax.random.normal(ks[5], (V,), jnp.float32),
    }

    # Per-step inputs (input_embed stands in for vocab_embedding lookups).
    input_embeds     = jax.random.normal(ks[6], (T, B, E), jnp.float32)
    decoder_hidden   = jax.random.normal(ks[7], (B, H), jnp.float32)
    calorie_encoding = jax.random.normal(ks[8], (B, CAL), jnp.float32)
    name_encoding    = jax.random.normal(ks[9], (B, NAME), jnp.float32)
    contexts         = [jax.random.normal(ks[10], (T, B, C), jnp.float32)]
    attn_fusion_ctx  = [jax.random.normal(ks[11], (T, B, ACTX), jnp.float32)]

    # One-time weight preparation (transpose, gate lane-padding, bf16 cast).
    prepared = prepare_params(raw_params, hidden_size=H)

    # TODO(synk): self.proj (vocab projection) and the vocab_embedding lookup are
    # declared in __init__ but unused inside forward_step; forward() itself is
    # abstract (NotImplementedError), so only forward_step / its unroll is here.

    # --- fused T-step kernel ------------------------------------------------
    rnn_seq, new_hidden, logits_seq = decoder_forward_seq(
        prepared, input_embeds, decoder_hidden, calorie_encoding, name_encoding,
        contexts, attn_fusion_ctx)
    jax.block_until_ready((rnn_seq, new_hidden, logits_seq))

    # --- pure-JAX f32 reference (step-by-step) -------------------------------
    h_ref = decoder_hidden
    ref_rnn, ref_logits = [], []
    for t in range(T):
        r_out, h_ref, lg = decoder_step_ref(
            raw_params, input_embeds[t], h_ref, calorie_encoding, name_encoding,
            [c[t] for c in contexts], [a[t] for a in attn_fusion_ctx])
        ref_rnn.append(r_out)
        ref_logits.append(lg)
    ref_rnn = jnp.stack(ref_rnn)
    ref_logits = jnp.stack(ref_logits)

    # bf16 weights change numerics slightly -> bf16-appropriate tolerances.
    assert rnn_seq.shape == (T, B, H) and logits_seq.shape == (T, B, V)
    assert jnp.allclose(rnn_seq, ref_rnn, atol=5e-2, rtol=5e-2), "rnn_output mismatch"
    assert jnp.allclose(new_hidden, ref_rnn[-1], atol=5e-2, rtol=5e-2), "hidden mismatch"
    assert jnp.allclose(logits_seq, ref_logits, atol=1e-1, rtol=5e-2), "logits mismatch"

    # --- single-step API (forward_step semantics) ----------------------------
    r1, h1, l1 = decoder_forward_step(
        prepared, input_embeds[0], decoder_hidden, calorie_encoding,
        name_encoding, [c[0] for c in contexts], [a[0] for a in attn_fusion_ctx])
    jax.block_until_ready((r1, h1, l1))
    assert r1.shape == (B, H) and l1.shape == (B, V)
    assert jnp.allclose(r1, ref_rnn[0], atol=5e-2, rtol=5e-2), "step rnn mismatch"
    assert jnp.allclose(h1, ref_rnn[0], atol=5e-2, rtol=5e-2), "step hidden mismatch"
    assert jnp.allclose(l1, ref_logits[0], atol=1e-1, rtol=5e-2), "step logits mismatch"

    print("KERNEL_OK")
</pallas_src>

<mosaic_0001>
module attributes {stable_mosaic.version = 11 : i64} {
  func.func @kernel(%arg0: i32, %arg1: memref<1x8x64xf32, #tpu.memory_space<vmem>>, %arg2: memref<1x8x112xf32, #tpu.memory_space<vmem>>, %arg3: memref<8x64xf32, #tpu.memory_space<vmem>>, %arg4: memref<64x384xbf16, #tpu.memory_space<vmem>>, %arg5: memref<64x384xbf16, #tpu.memory_space<vmem>>, %arg6: memref<1x384xf32, #tpu.memory_space<vmem>>, %arg7: memref<1x384xf32, #tpu.memory_space<vmem>>, %arg8: memref<64x128xbf16, #tpu.memory_space<vmem>>, %arg9: memref<112x128xbf16, #tpu.memory_space<vmem>>, %arg10: memref<1x128xf32, #tpu.memory_space<vmem>>, %arg11: memref<1x8x64xf32, #tpu.memory_space<vmem>>, %arg12: memref<1x8x128xf32, #tpu.memory_space<vmem>>, %arg13: memref<8x64xf32, #tpu.memory_space<vmem>>) attributes {dimension_semantics = [#tpu.dimension_semantics<arbitrary>], iteration_bounds = array<i64: 4>, scalar_prefetch = 0 : i64, scratch_operands = 1 : i64, tpu.core_type = #tpu.core_type<tc>, window_params = [{transform_indices = @transform_0, window_bounds = array<i64: 1, 8, 64>}, {transform_indices = @transform_1, window_bounds = array<i64: 1, 8, 112>}, {pipeline_mode = #tpu.pipeline_mode<synchronous>, transform_indices = @transform_2, window_bounds = array<i64: 8, 64>}, {pipeline_mode = #tpu.pipeline_mode<synchronous>, transform_indices = @transform_3, window_bounds = array<i64: 64, 384>}, {pipeline_mode = #tpu.pipeline_mode<synchronous>, transform_indices = @transform_4, window_bounds = array<i64: 64, 384>}, {pipeline_mode = #tpu.pipeline_mode<synchronous>, transform_indices = @transform_5, window_bounds = array<i64: 1, 384>}, {pipeline_mode = #tpu.pipeline_mode<synchronous>, transform_indices = @transform_6, window_bounds = array<i64: 1, 384>}, {pipeline_mode = #tpu.pipeline_mode<synchronous>, transform_indices = @transform_7, window_bounds = array<i64: 64, 128>}, {pipeline_mode = #tpu.pipeline_mode<synchronous>, transform_indices = @transform_8, window_bounds = array<i64: 112, 128>}, {pipeline_mode = #tpu.pipeline_mode<synchronous>, transform_indices = @transform_9, window_bounds = array<i64: 1, 128>}, {transform_indices = @transform_10, window_bounds = array<i64: 1, 8, 64>}, {transform_indices = @transform_11, window_bounds = array<i64: 1, 8, 128>}]} {
    %c0_i32 = arith.constant 0 : i32
    %0 = arith.cmpi eq, %arg0, %c0_i32 : i32
    %1 = arith.extui %0 : i1 to i32
    %c0_i32_0 = arith.constant 0 : i32
    %2 = arith.cmpi ne, %1, %c0_i32_0 : i32
    scf.if %2 {
      %c0_36 = arith.constant 0 : index
      %c0_37 = arith.constant 0 : index
      %63 = vector.load %arg3[%c0_36, %c0_37] : memref<8x64xf32, #tpu.memory_space<vmem>>, vector<8x64xf32>
      %c0_38 = arith.constant 0 : index
      %c0_39 = arith.constant 0 : index
      %64 = vector.load %arg13[%c0_38, %c0_39] : memref<8x64xf32, #tpu.memory_space<vmem>>, vector<8x64xf32>
      tpu.vector_store %arg13[%c0_38, %c0_39], %63 {strides = array<i32>} : memref<8x64xf32, #tpu.memory_space<vmem>>, vector<8x64xf32>,
    } else {
    }
    %c0 = arith.constant 0 : index
    %c0_1 = arith.constant 0 : index
    %3 = vector.load %arg13[%c0, %c0_1] : memref<8x64xf32, #tpu.memory_space<vmem>>, vector<8x64xf32>
    %c0_2 = arith.constant 0 : index
    %c0_3 = arith.constant 0 : index
    %c0_4 = arith.constant 0 : index
    %4 = vector.load %arg1[%c0_2, %c0_3, %c0_4] : memref<1x8x64xf32, #tpu.memory_space<vmem>>, vector<1x8x64xf32>
    %5 = vector.shape_cast %4 : vector<1x8x64xf32> to vector<8x64xf32>
    %6 = arith.truncf %5 : vector<8x64xf32> to vector<8x64xbf16>
    %c0_5 = arith.constant 0 : index
    %c0_6 = arith.constant 0 : index
    %7 = vector.load %arg4[%c0_5, %c0_6] : memref<64x384xbf16, #tpu.memory_space<vmem>>, vector<64x384xbf16>
    %cst = arith.constant dense<0.000000e+00> : vector<8x384xf32>
    %8 = tpu.matmul %6, %7, %cst {dimension_numbers = #tpu.dot_dimension_numbers<[1], [0], [0], [1], [0, 0, 1, 1], [], []>} : vector<8x64xbf16>, vector<64x384xbf16>, vector<8x384xf32> -> vector<8x384xf32>
    %c0_7 = arith.constant 0 : index
    %c0_8 = arith.constant 0 : index
    %9 = vector.load %arg6[%c0_7, %c0_8] : memref<1x384xf32, #tpu.memory_space<vmem>>, vector<1x384xf32>
    %10 = vector.broadcast %9 : vector<1x384xf32> to vector<8x384xf32>
    %11 = arith.addf %8, %10 : vector<8x384xf32>
    %12 = arith.truncf %3 : vector<8x64xf32> to vector<8x64xbf16>
    %c0_9 = arith.constant 0 : index
    %c0_10 = arith.constant 0 : index
    %13 = vector.load %arg5[%c0_9, %c0_10] : memref<64x384xbf16, #tpu.memory_space<vmem>>, vector<64x384xbf16>
    %cst_11 = arith.constant dense<0.000000e+00> : vector<8x384xf32>
    %14 = tpu.matmul %12, %13, %cst_11 {dimension_numbers = #tpu.dot_dimension_numbers<[1], [0], [0], [1], [0, 0, 1, 1], [], []>} : vector<8x64xbf16>, vector<64x384xbf16>, vector<8x384xf32> -> vector<8x384xf32>
    %c0_12 = arith.constant 0 : index
    %c0_13 = arith.constant 0 : index
    %15 = vector.load %arg7[%c0_12, %c0_13] : memref<1x384xf32, #tpu.memory_space<vmem>>, vector<1x384xf32>
    %16 = vector.broadcast %15 : vector<1x384xf32> to vector<8x384xf32>
    %17 = arith.addf %14, %16 : vector<8x384xf32>
    %18 = vector.extract_strided_slice %11 {offsets = [0, 0], sizes = [8, 64], strides = [1, 1]} : vector<8x384xf32> to vector<8x64xf32>
    %19 = vector.extract_strided_slice %11 {offsets = [0, 128], sizes = [8, 64], strides = [1, 1]} : vector<8x384xf32> to vector<8x64xf32>
    %20 = vector.extract_strided_slice %11 {offsets = [0, 256], sizes = [8, 64], strides = [1, 1]} : vector<8x384xf32> to vector<8x64xf32>
    %21 = vector.extract_strided_slice %17 {offsets = [0, 0], sizes = [8, 64], strides = [1, 1]} : vector<8x384xf32> to vector<8x64xf32>
    %22 = vector.extract_strided_slice %17 {offsets = [0, 128], sizes = [8, 64], strides = [1, 1]} : vector<8x384xf32> to vector<8x64xf32>
    %23 = vector.extract_strided_slice %17 {offsets = [0, 256], sizes = [8, 64], strides = [1, 1]} : vector<8x384xf32> to vector<8x64xf32>
    %24 = arith.addf %18, %21 : vector<8x64xf32>
    %25 = arith.negf %24 : vector<8x64xf32>
    %26 = math.exp %25 : vector<8x64xf32>
    %cst_14 = arith.constant 1.000000e+00 : f32
    %27 = vector.broadcast %cst_14 : f32 to vector<8x64xf32>
    %28 = arith.addf %27, %26 : vector<8x64xf32>
    %29 = arith.divf %27, %28 : vector<8x64xf32>
    %30 = arith.addf %19, %22 : vector<8x64xf32>
    %31 = arith.negf %30 : vector<8x64xf32>
    %32 = math.exp %31 : vector<8x64xf32>
    %cst_15 = arith.constant 1.000000e+00 : f32
    %33 = vector.broadcast %cst_15 : f32 to vector<8x64xf32>
    %34 = arith.addf %33, %32 : vector<8x64xf32>
    %35 = arith.divf %33, %34 : vector<8x64xf32>
    %36 = arith.mulf %29, %23 : vector<8x64xf32>
    %37 = arith.addf %20, %36 : vector<8x64xf32>
    %38 = math.tanh %37 : vector<8x64xf32>
    %cst_16 = arith.constant 1.000000e+00 : f32
    %39 = vector.broadcast %cst_16 : f32 to vector<8x64xf32>
    %40 = arith.subf %39, %35 : vector<8x64xf32>
    %41 = arith.mulf %40, %38 : vector<8x64xf32>
    %42 = arith.mulf %35, %3 : vector<8x64xf32>
    %43 = arith.addf %41, %42 : vector<8x64xf32>
    %c0_17 = arith.constant 0 : index
    %c0_18 = arith.constant 0 : index
    %44 = vector.load %arg13[%c0_17, %c0_18] : memref<8x64xf32, #tpu.memory_space<vmem>>, vector<8x64xf32>
    tpu.vector_store %arg13[%c0_17, %c0_18], %43 {strides = array<i32>} : memref<8x64xf32, #tpu.memory_space<vmem>>, vector<8x64xf32>,
    %c0_19 = arith.constant 0 : index
    %c0_20 = arith.constant 0 : index
    %c0_21 = arith.constant 0 : index
    %45 = vector.load %arg11[%c0_19, %c0_20, %c0_21] : memref<1x8x64xf32, #tpu.memory_space<vmem>>, vector<1x8x64xf32>
    %46 = vector.shape_cast %45 : vector<1x8x64xf32> to vector<8x64xf32>
    %47 = vector.shape_cast %43 : vector<8x64xf32> to vector<1x8x64xf32>
    tpu.vector_store %arg11[%c0_19, %c0_20, %c0_21], %47 {strides = array<i32>} : memref<1x8x64xf32, #tpu.memory_space<vmem>>, vector<1x8x64xf32>,
    %48 = arith.truncf %43 : vector<8x64xf32> to vector<8x64xbf16>
    %c0_22 = arith.constant 0 : index
    %c0_23 = arith.constant 0 : index
    %49 = vector.load %arg8[%c0_22, %c0_23] : memref<64x128xbf16, #tpu.memory_space<vmem>>, vector<64x128xbf16>
    %cst_24 = arith.constant dense<0.000000e+00> : vector<8x128xf32>
    %50 = tpu.matmul %48, %49, %cst_24 {dimension_numbers = #tpu.dot_dimension_numbers<[1], [0], [0], [1], [0, 0, 1, 1], [], []>} : vector<8x64xbf16>, vector<64x128xbf16>, vector<8x128xf32> -> vector<8x128xf32>
    %c0_25 = arith.constant 0 : index
    %c0_26 = arith.constant 0 : index
    %c0_27 = arith.constant 0 : index
    %51 = vector.load %arg2[%c0_25, %c0_26, %c0_27] : memref<1x8x112xf32, #tpu.memory_space<vmem>>, vector<1x8x112xf32>
    %52 = vector.shape_cast %51 : vector<1x8x112xf32> to vector<8x112xf32>
    %53 = arith.truncf %52 : vector<8x112xf32> to vector<8x112xbf16>
    %c0_28 = arith.constant 0 : index
    %c0_29 = arith.constant 0 : index
    %54 = vector.load %arg9[%c0_28, %c0_29] : memref<112x128xbf16, #tpu.memory_space<vmem>>, vector<112x128xbf16>
    %cst_30 = arith.constant dense<0.000000e+00> : vector<8x128xf32>
    %55 = tpu.matmul %53, %54, %cst_30 {dimension_numbers = #tpu.dot_dimension_numbers<[1], [0], [0], [1], [0, 0, 1, 1], [], []>} : vector<8x112xbf16>, vector<112x128xbf16>, vector<8x128xf32> -> vector<8x128xf32>
    %56 = arith.addf %50, %55 : vector<8x128xf32>
    %c0_31 = arith.constant 0 : index
    %c0_32 = arith.constant 0 : index
    %57 = vector.load %arg10[%c0_31, %c0_32] : memref<1x128xf32, #tpu.memory_space<vmem>>, vector<1x128xf32>
    %58 = vector.broadcast %57 : vector<1x128xf32> to vector<8x128xf32>
    %59 = arith.addf %56, %58 : vector<8x128xf32>
    %c0_33 = arith.constant 0 : index
    %c0_34 = arith.constant 0 : index
    %c0_35 = arith.constant 0 : index
    %60 = vector.load %arg12[%c0_33, %c0_34, %c0_35] : memref<1x8x128xf32, #tpu.memory_space<vmem>>, vector<1x8x128xf32>
    %61 = vector.shape_cast %60 : vector<1x8x128xf32> to vector<8x128xf32>
    %62 = vector.shape_cast %59 : vector<8x128xf32> to vector<1x8x128xf32>
    tpu.vector_store %arg12[%c0_33, %c0_34, %c0_35], %62 {strides = array<i32>} : memref<1x8x128xf32, #tpu.memory_space<vmem>>, vector<1x8x128xf32>,
    return
  }
  func.func @transform_0(%arg0: i32) -> (i32, i32, i32) {
    %c0_i32 = arith.constant 0 : i32
    %c0_i32_0 = arith.constant 0 : i32
    %c0_i32_1 = arith.constant 0 : i32
    return %arg0, %c0_i32, %c0_i32_0 : i32, i32, i32
  }
  func.func @transform_1(%arg0: i32) -> (i32, i32, i32) {
    %c0_i32 = arith.constant 0 : i32
    %c0_i32_0 = arith.constant 0 : i32
    %c0_i32_1 = arith.constant 0 : i32
    return %arg0, %c0_i32, %c0_i32_0 : i32, i32, i32
  }
  func.func @transform_2(%arg0: i32) -> (i32, i32) {
    %c0_i32 = arith.constant 0 : i32
    %c0_i32_0 = arith.constant 0 : i32
    %c0_i32_1 = arith.constant 0 : i32
    return %c0_i32, %c0_i32_0 : i32, i32
  }
  func.func @transform_3(%arg0: i32) -> (i32, i32) {
    %c0_i32 = arith.constant 0 : i32
    %c0_i32_0 = arith.constant 0 : i32
    %c0_i32_1 = arith.constant 0 : i32
    return %c0_i32, %c0_i32_0 : i32, i32
  }
  func.func @transform_4(%arg0: i32) -> (i32, i32) {
    %c0_i32 = arith.constant 0 : i32
    %c0_i32_0 = arith.constant 0 : i32
    %c0_i32_1 = arith.constant 0 : i32
    return %c0_i32, %c0_i32_0 : i32, i32
  }
  func.func @transform_5(%arg0: i32) -> (i32, i32) {
    %c0_i32 = arith.constant 0 : i32
    %c0_i32_0 = arith.constant 0 : i32
    %c0_i32_1 = arith.constant 0 : i32
    return %c0_i32, %c0_i32_0 : i32, i32
  }
  func.func @transform_6(%arg0: i32) -> (i32, i32) {
    %c0_i32 = arith.constant 0 : i32
    %c0_i32_0 = arith.constant 0 : i32
    %c0_i32_1 = arith.constant 0 : i32
    return %c0_i32, %c0_i32_0 : i32, i32
  }
  func.func @transform_7(%arg0: i32) -> (i32, i32) {
    %c0_i32 = arith.constant 0 : i32
    %c0_i32_0 = arith.constant 0 : i32
    %c0_i32_1 = arith.constant 0 : i32
    return %c0_i32, %c0_i32_0 : i32, i32
  }
  func.func @transform_8(%arg0: i32) -> (i32, i32) {
    %c0_i32 = arith.constant 0 : i32
    %c0_i32_0 = arith.constant 0 : i32
    %c0_i32_1 = arith.constant 0 : i32
    return %c0_i32, %c0_i32_0 : i32, i32
  }
  func.func @transform_9(%arg0: i32) -> (i32, i32) {
    %c0_i32 = arith.constant 0 : i32
    %c0_i32_0 = arith.constant 0 : i32
    %c0_i32_1 = arith.constant 0 : i32
    return %c0_i32, %c0_i32_0 : i32, i32
  }
  func.func @transform_10(%arg0: i32) -> (i32, i32, i32) {
    %c0_i32 = arith.constant 0 : i32
    %c0_i32_0 = arith.constant 0 : i32
    %c0_i32_1 = arith.constant 0 : i32
    return %arg0, %c0_i32, %c0_i32_0 : i32, i32, i32
  }
  func.func @transform_11(%arg0: i32) -> (i32, i32, i32) {
    %c0_i32 = arith.constant 0 : i32
    %c0_i32_0 = arith.constant 0 : i32
    %c0_i32_1 = arith.constant 0 : i32
    return %arg0, %c0_i32, %c0_i32_0 : i32, i32, i32
  }
}

</mosaic_0001>

<llo_original>
// kernel: tpu_custom_call.1
$region0: #{tpu_custom_call.1}
  #allocation0 [shape = 'u32[]', space=smem, size = 0x4, offset = 0x4, fixed_abs, tag = 'smem constant byte address 0x4 - core index']
  #allocation1 [shape = 'u32[72,128]{1,0:T(1,128)}', space=vmem, size = 0x9000, scoped, tag = 'internal scratch']
  #allocation2 [shape = 'f32[8,64]{1,0:T(8,128)}', space=vmem, size = 0x1000, scoped, tag = 'scratch operand']
  %s0 = inlined_call_operand.hbm [shape: f32[4,8,64], index: 0, kind: input, shape index: {}]
  %s1 = inlined_call_operand.hbm [shape: f32[4,8,112], index: 1, kind: input, shape index: {}]
  %s2 = inlined_call_operand.hbm [shape: f32[8,64], index: 2, kind: input, shape index: {}]
  %s3 = inlined_call_operand.hbm [shape: bf16[64,384], index: 3, kind: input, shape index: {}]
  %s4 = inlined_call_operand.hbm [shape: bf16[64,384], index: 4, kind: input, shape index: {}]
  %s5 = inlined_call_operand.vmem [shape: f32[1,384], index: 5, kind: input, shape index: {}]
  %s6 = inlined_call_operand.hbm [shape: f32[1,384], index: 6, kind: input, shape index: {}]
  %s7 = inlined_call_operand.hbm [shape: bf16[64,128], index: 7, kind: input, shape index: {}]
  %s8 = inlined_call_operand.hbm [shape: bf16[112,128], index: 8, kind: input, shape index: {}]
  %s9 = inlined_call_operand.vmem [shape: f32[1,128], index: 9, kind: input, shape index: {}]
  %s10 = inlined_call_operand.hbm [shape: f32[4,8,64], index: 10, kind: output, shape index: {0}]
  %s11 = inlined_call_operand.hbm [shape: f32[4,8,128], index: 11, kind: output, shape index: {1}]
  %12 = xla_tuple %s10, %s11
  %s13 = sld [smem:[#allocation0]]
  $region117: #{tpu_custom_call.1} parent=0
    _
  %s15 = ssub.s32 1, %s13
  %s16 = scalar_select 0, %s15, %s13
  $region1: #{tpu_custom_call.1} parent=0
    #allocation3 [shape = 'u8[8192]{0}', space=vmem, size = 0x2000, scoped, tag = 'input window, operand 0']
    #allocation4 [shape = 's32[2]{0}', space=sflag, size = 0x8, scoped, tag = 'scoped memory for tpu_custom_call.1']
    #allocation5 [shape = 's32[2]{0}', space=sflag, size = 0x8, scoped, tag = 'scoped memory for tpu_custom_call.1']
    #allocation6 [shape = 'u8[8192]{0}', space=vmem, size = 0x2000, scoped, tag = 'input window, operand 1']
    #allocation7 [shape = 's32[2]{0}', space=sflag, size = 0x8, scoped, tag = 'scoped memory for tpu_custom_call.1']
    #allocation8 [shape = 'u8[4096]{0}', space=vmem, size = 0x1000, scoped, tag = 'input window, operand 2, single buffered']
    #allocation9 [shape = 'u8[49152]{0}', space=vmem, size = 0xc000, scoped, tag = 'input window, operand 3, single buffered']
    #allocation10 [shape = 's32[1]{0}', space=sflag, size = 0x4, scoped, tag = 'scoped memory for tpu_custom_call.1']
    #allocation11 [shape = 'u8[49152]{0}', space=vmem, size = 0xc000, scoped, tag = 'input window, operand 4, single buffered']
    #allocation12 [shape = 'u8[1536]{0}', space=vmem, size = 0x800, scoped, tag = 'input window, operand 6, single buffered']
    #allocation13 [shape = 's32[1]{0}', space=sflag, size = 0x4, scoped, tag = 'scoped memory for tpu_custom_call.1']
    #allocation14 [shape = 'u8[16384]{0}', space=vmem, size = 0x4000, scoped, tag = 'input window, operand 7, single buffered']
    #allocation15 [shape = 'u8[28672]{0}', space=vmem, size = 0x7000, scoped, tag = 'input window, operand 8, single buffered']
    #allocation16 [shape = 's32[1]{0}', space=sflag, size = 0x4, scoped, tag = 'scoped memory for tpu_custom_call.1']
    #allocation17 [shape = 'u8[8192]{0}', space=vmem, size = 0x2000, scoped, tag = 'output window, operand 0']
    #allocation18 [shape = 'u8[8192]{0}', space=vmem, size = 0x2000, scoped, tag = 'output window, operand 1']
    #allocation19 [shape = 's32[2]{0}', space=sflag, size = 0x8, scoped, tag = 'scoped memory for tpu_custom_call.1']
    %17 = vsyncpa [#allocation4], 0
    %s18 = scalar_lea.sflag [#allocation4], 1
    %19 = vsyncpa %s18, 0
    %20 = vsyncpa [#allocation7], 0
    %s21 = scalar_lea.sflag [#allocation7], 1
    %22 = vsyncpa %s21, 0
    %23 = vsyncpa [#allocation10], 0
    %24 = vsyncpa [#allocation13], 0
    %25 = vsyncpa [#allocation16], 0
    %26 = vsyncpa [#allocation5], 0
    %s27 = scalar_lea.sflag [#allocation5], 1
    %28 = vsyncpa %s27, 0
    %29 = vsyncpa [#allocation19], 0
    %s30 = scalar_lea.sflag [#allocation19], 1
    %31 = vsyncpa %s30, 0
    loop: start=0, step=1, limit=6
    $region2: #{tpu_custom_call.1} parent=1 // loop_pre_header
      _
    $region3: #{tpu_custom_call.1} parent=1 // loop_header
      %s33 = sphi 0, %s37
      %p34 = scmp.ge.s32.totalorder %s33, 6
      %s43 = sphi 0, %s45
      %s46 = sphi 0, %s43
      %s47 = sphi 0, %s46
      %s63 = sphi 0, %s47
      %s69 = sphi 0, %s71
      %s72 = sphi 0, %s69
      %s73 = sphi 0, %s72
      %s89 = sphi 0, %s73
      %s93 = sphi 0, %s93
      %s95 = sphi 0, %s93
      %s96 = sphi 0, %s95
      %s110 = sphi 0, %s96
      %s114 = sphi 0, %s114
      %s116 = sphi 0, %s114
      %s117 = sphi 0, %s116
      %s131 = sphi 0, %s117
      %s135 = sphi 0, %s135
      %s137 = sphi 0, %s135
      %s138 = sphi 0, %s137
      %s152 = sphi 0, %s138
      %s156 = sphi 0, %s156
      %s158 = sphi 0, %s156
      %s159 = sphi 0, %s158
      %s173 = sphi 0, %s159
      %s177 = sphi 0, %s177
      %s179 = sphi 0, %s177
      %s180 = sphi 0, %s179
      %s194 = sphi 0, %s180
      %s198 = sphi 0, %s198
      %s200 = sphi 0, %s198
      %s201 = sphi 0, %s200
      %s215 = sphi 0, %s201
      %s219 = sphi 0, %s219
      %s221 = sphi 0, %s219
      %s222 = sphi 0, %s221
      %s236 = sphi 0, %s222
      %s240 = sphi 0, %s240
      %s242 = sphi 0, %s240
      %s243 = sphi 0, %s242
      %s257 = sphi 0, %s243
      %s263 = sphi 0, %s265
      %s266 = sphi 0, %s263
      %s267 = sphi 0, %s266
      %s283 = sphi 0, %s267
      %s289 = sphi 0, %s291
      %s292 = sphi 0, %s289
      %s293 = sphi 0, %s292
      %s309 = sphi 0, %s293
    $region4: #{tpu_custom_call.1} parent=1 // loop_header_branch
      %36 = sbr.rel (%p34) target = $region8
    $region5: #{tpu_custom_call.1} parent=1 // loop_body
      %s38 = ssub.s32 %s33, 1
      %s39 = ssub.s32 %s33, 2
      %s40 = sadd.s32 %s33, 1
      %s41 = ssub.s32 %s33, %s40
      %p42 = scmp.eq.s32.totalorder %s41, 0
      %s44 = sadd.s32 %s43, 1
      %s45 = scalar_select %p42, %s43, %s44
      %p48 = pneg %p42
      %p49 = scmp.eq.s32.totalorder %s33, 3
      %p50 = por %p48, %p49
      %p51 = scmp.ne.s32.totalorder %s43, %s46
      %p52 = scmp.eq.s32.totalorder %s33, 0
      %p53 = por %p51, %p52
      %p54 = scmp.ne.s32.totalorder %s43, %s46
      %p55 = scmp.eq.s32.totalorder %s38, 3
      %p56 = por %p54, %p55
      %p57 = scmp.ne.s32.totalorder %s46, %s47
      %p58 = scmp.eq.s32.totalorder %s38, 0
      %p59 = por %p57, %p58
      %p60 = scmp.ne.s32.totalorder %s46, %s47
      %p61 = scmp.eq.s32.totalorder %s39, 3
      %p62 = por %p60, %p61
      %p64 = scmp.ne.s32.totalorder %s47, %s63
      %p65 = scmp.eq.s32.totalorder %s39, 0
      %p66 = por %p64, %p65
      %s67 = ssub.s32 %s33, %s40
      %p68 = scmp.eq.s32.totalorder %s67, 0
      %s70 = sadd.s32 %s69, 1
      %s71 = scalar_select %p68, %s69, %s70
      %p74 = pneg %p68
      %p75 = scmp.eq.s32.totalorder %s33, 3
      %p76 = por %p74, %p75
      %p77 = scmp.ne.s32.totalorder %s69, %s72
      %p78 = scmp.eq.s32.totalorder %s33, 0
      %p79 = por %p77, %p78
      %p80 = scmp.ne.s32.totalorder %s69, %s72
      %p81 = scmp.eq.s32.totalorder %s38, 3
      %p82 = por %p80, %p81
      %p83 = scmp.ne.s32.totalorder %s72, %s73
      %p84 = scmp.eq.s32.totalorder %s38, 0
      %p85 = por %p83, %p84
      %p86 = scmp.ne.s32.totalorder %s72, %s73
      %p87 = scmp.eq.s32.totalorder %s39, 3
      %p88 = por %p86, %p87
      %p90 = scmp.ne.s32.totalorder %s73, %s89
      %p91 = scmp.eq.s32.totalorder %s39, 0
      %p92 = por %p90, %p91
      %s94 = sadd.s32 %s93, 1
      %p97 = scmp.eq.s32.totalorder %s33, 3
      %p98 = scmp.ne.s32.totalorder %s93, %s95
      %p99 = scmp.eq.s32.totalorder %s33, 0
      %p100 = por %p98, %p99
      %p101 = scmp.ne.s32.totalorder %s93, %s95
      %p102 = scmp.eq.s32.totalorder %s38, 3
      %p103 = por %p101, %p102
      %p104 = scmp.ne.s32.totalorder %s95, %s96
      %p105 = scmp.eq.s32.totalorder %s38, 0
      %p106 = por %p104, %p105
      %p107 = scmp.ne.s32.totalorder %s95, %s96
      %p108 = scmp.eq.s32.totalorder %s39, 3
      %p109 = por %p107, %p108
      %p111 = scmp.ne.s32.totalorder %s96, %s110
      %p112 = scmp.eq.s32.totalorder %s39, 0
      %p113 = por %p111, %p112
      %s115 = sadd.s32 %s114, 1
      %p118 = scmp.eq.s32.totalorder %s33, 3
      %p119 = scmp.ne.s32.totalorder %s114, %s116
      %p120 = scmp.eq.s32.totalorder %s33, 0
      %p121 = por %p119, %p120
      %p122 = scmp.ne.s32.totalorder %s114, %s116
      %p123 = scmp.eq.s32.totalorder %s38, 3
      %p124 = por %p122, %p123
      %p125 = scmp.ne.s32.totalorder %s116, %s117
      %p126 = scmp.eq.s32.totalorder %s38, 0
      %p127 = por %p125, %p126
      %p128 = scmp.ne.s32.totalorder %s116, %s117
      %p129 = scmp.eq.s32.totalorder %s39, 3
      %p130 = por %p128, %p129
      %p132 = scmp.ne.s32.totalorder %s117, %s131
      %p133 = scmp.eq.s32.totalorder %s39, 0
      %p134 = por %p132, %p133
      %s136 = sadd.s32 %s135, 1
      %p139 = scmp.eq.s32.totalorder %s33, 3
      %p140 = scmp.ne.s32.totalorder %s135, %s137
      %p141 = scmp.eq.s32.totalorder %s33, 0
      %p142 = por %p140, %p141
      %p143 = scmp.ne.s32.totalorder %s135, %s137
      %p144 = scmp.eq.s32.totalorder %s38, 3
      %p145 = por %p143, %p144
      %p146 = scmp.ne.s32.totalorder %s137, %s138
      %p147 = scmp.eq.s32.totalorder %s38, 0
      %p148 = por %p146, %p147
      %p149 = scmp.ne.s32.totalorder %s137, %s138
      %p150 = scmp.eq.s32.totalorder %s39, 3
      %p151 = por %p149, %p150
      %p153 = scmp.ne.s32.totalorder %s138, %s152
      %p154 = scmp.eq.s32.totalorder %s39, 0
      %p155 = por %p153, %p154
      %s157 = sadd.s32 %s156, 1
      %p160 = scmp.eq.s32.totalorder %s33, 3
      %p161 = scmp.ne.s32.totalorder %s156, %s158
      %p162 = scmp.eq.s32.totalorder %s33, 0
      %p163 = por %p161, %p162
      %p164 = scmp.ne.s32.totalorder %s156, %s158
      %p165 = scmp.eq.s32.totalorder %s38, 3
      %p166 = por %p164, %p165
      %p167 = scmp.ne.s32.totalorder %s158, %s159
      %p168 = scmp.eq.s32.totalorder %s38, 0
      %p169 = por %p167, %p168
      %p170 = scmp.ne.s32.totalorder %s158, %s159
      %p171 = scmp.eq.s32.totalorder %s39, 3
      %p172 = por %p170, %p171
      %p174 = scmp.ne.s32.totalorder %s159, %s173
      %p175 = scmp.eq.s32.totalorder %s39, 0
      %p176 = por %p174, %p175
      %s178 = sadd.s32 %s177, 1
      %p181 = scmp.eq.s32.totalorder %s33, 3
      %p182 = scmp.ne.s32.totalorder %s177, %s179
      %p183 = scmp.eq.s32.totalorder %s33, 0
      %p184 = por %p182, %p183
      %p185 = scmp.ne.s32.totalorder %s177, %s179
      %p186 = scmp.eq.s32.totalorder %s38, 3
      %p187 = por %p185, %p186
      %p188 = scmp.ne.s32.totalorder %s179, %s180
      %p189 = scmp.eq.s32.totalorder %s38, 0
      %p190 = por %p188, %p189
      %p191 = scmp.ne.s32.totalorder %s179, %s180
      %p192 = scmp.eq.s32.totalorder %s39, 3
      %p193 = por %p191, %p192
      %p195 = scmp.ne.s32.totalorder %s180, %s194
      %p196 = scmp.eq.s32.totalorder %s39, 0
      %p197 = por %p195, %p196
      %s199 = sadd.s32 %s198, 1
      %p202 = scmp.eq.s32.totalorder %s33, 3
      %p203 = scmp.ne.s32.totalorder %s198, %s200
      %p204 = scmp.eq.s32.totalorder %s33, 0
      %p205 = por %p203, %p204
      %p206 = scmp.ne.s32.totalorder %s198, %s200
      %p207 = scmp.eq.s32.totalorder %s38, 3
      %p208 = por %p206, %p207
      %p209 = scmp.ne.s32.totalorder %s200, %s201
      %p210 = scmp.eq.s32.totalorder %s38, 0
      %p211 = por %p209, %p210
      %p212 = scmp.ne.s32.totalorder %s200, %s201
      %p213 = scmp.eq.s32.totalorder %s39, 3
      %p214 = por %p212, %p213
      %p216 = scmp.ne.s32.totalorder %s201, %s215
      %p217 = scmp.eq.s32.totalorder %s39, 0
      %p218 = por %p216, %p217
      %s220 = sadd.s32 %s219, 1
      %p223 = scmp.eq.s32.totalorder %s33, 3
      %p224 = scmp.ne.s32.totalorder %s219, %s221
      %p225 = scmp.eq.s32.totalorder %s33, 0
      %p226 = por %p224, %p225
      %p227 = scmp.ne.s32.totalorder %s219, %s221
      %p228 = scmp.eq.s32.totalorder %s38, 3
      %p229 = por %p227, %p228
      %p230 = scmp.ne.s32.totalorder %s221, %s222
      %p231 = scmp.eq.s32.totalorder %s38, 0
      %p232 = por %p230, %p231
      %p233 = scmp.ne.s32.totalorder %s221, %s222
      %p234 = scmp.eq.s32.totalorder %s39, 3
      %p235 = por %p233, %p234
      %p237 = scmp.ne.s32.totalorder %s222, %s236
      %p238 = scmp.eq.s32.totalorder %s39, 0
      %p239 = por %p237, %p238
      %s241 = sadd.s32 %s240, 1
      %p244 = scmp.eq.s32.totalorder %s33, 3
      %p245 = scmp.ne.s32.totalorder %s240, %s242
      %p246 = scmp.eq.s32.totalorder %s33, 0
      %p247 = por %p245, %p246
      %p248 = scmp.ne.s32.totalorder %s240, %s242
      %p249 = scmp.eq.s32.totalorder %s38, 3
      %p250 = por %p248, %p249
      %p251 = scmp.ne.s32.totalorder %s242, %s243
      %p252 = scmp.eq.s32.totalorder %s38, 0
      %p253 = por %p251, %p252
      %p254 = scmp.ne.s32.totalorder %s242, %s243
      %p255 = scmp.eq.s32.totalorder %s39, 3
      %p256 = por %p254, %p255
      %p258 = scmp.ne.s32.totalorder %s243, %s257
      %p259 = scmp.eq.s32.totalorder %s39, 0
      %p260 = por %p258, %p259
      %s261 = ssub.s32 %s33, %s40
      %p262 = scmp.eq.s32.totalorder %s261, 0
      %s264 = sadd.s32 %s263, 1
      %s265 = scalar_select %p262, %s263, %s264
      %p268 = pneg %p262
      %p269 = scmp.eq.s32.totalorder %s33, 3
      %p270 = por %p268, %p269
      %p271 = scmp.ne.s32.totalorder %s263, %s266
      %p272 = scmp.eq.s32.totalorder %s33, 0
      %p273 = por %p271, %p272
      %p274 = scmp.ne.s32.totalorder %s263, %s266
      %p275 = scmp.eq.s32.totalorder %s38, 3
      %p276 = por %p274, %p275
      %p277 = scmp.ne.s32.totalorder %s266, %s267
      %p278 = scmp.eq.s32.totalorder %s38, 0
      %p279 = por %p277, %p278
      %p280 = scmp.ne.s32.totalorder %s266, %s267
      %p281 = scmp.eq.s32.totalorder %s39, 3
      %p282 = por %p280, %p281
      %p284 = scmp.ne.s32.totalorder %s267, %s283
      %p285 = scmp.eq.s32.totalorder %s39, 0
      %p286 = por %p284, %p285
      %s287 = ssub.s32 %s33, %s40
      %p288 = scmp.eq.s32.totalorder %s287, 0
      %s290 = sadd.s32 %s289, 1
      %s291 = scalar_select %p288, %s289, %s290
      %p294 = pneg %p288
      %p295 = scmp.eq.s32.totalorder %s33, 3
      %p296 = por %p294, %p295
      %p297 = scmp.ne.s32.totalorder %s289, %s292
      %p298 = scmp.eq.s32.totalorder %s33, 0
      %p299 = por %p297, %p298
      %p300 = scmp.ne.s32.totalorder %s289, %s292
      %p301 = scmp.eq.s32.totalorder %s38, 3
      %p302 = por %p300, %p301
      %p303 = scmp.ne.s32.totalorder %s292, %s293
      %p304 = scmp.eq.s32.totalorder %s38, 0
      %p305 = por %p303, %p304
      %p306 = scmp.ne.s32.totalorder %s292, %s293
      %p307 = scmp.eq.s32.totalorder %s39, 3
      %p308 = por %p306, %p307
      %p310 = scmp.ne.s32.totalorder %s293, %s309
      %p311 = scmp.eq.s32.totalorder %s39, 0
      %p312 = por %p310, %p311
      %p313 = scmp.le.s32.totalorder 1, %s33
      %p314 = scmp.lt.s32.totalorder %s33, 5
      %p315 = pnand %p313, %p314
      %p316 = pneg %p315
      // Predicated region
      $region9: #{tpu_custom_call.1} parent=5 // pred_check
        _
      $region10: #{tpu_custom_call.1} parent=5 // pred_check_branch
        %318 = sbr.rel (%p315) target = $region12
      $region11: #{tpu_custom_call.1} parent=5 // pred_region
        %s319 = ssub.s32 %s33, 1
        // Predicated region
        $region13: #{tpu_custom_call.1} parent=11 // pred_check
          %p320 = pneg %p106
        $region14: #{tpu_custom_call.1} parent=11 // pred_check_branch
          %322 = sbr.rel (%p320) target = $region16
        $region15: #{tpu_custom_call.1} parent=11 // pred_region
          %324 = vsyncadd [#allocation7], 0
          %s326 = sshll.u32 %s2, 4
          %s327 = int_to_ptr.hbm [resolvable:$true] %s326
          %s328 = sshll.u32 [#allocation8], 4
          %s329 = int_to_ptr.vmem [resolvable:$true] %s328
          %331 = dma.hbm_to_vmem [thread:$0]  %s327, 128, %s329, [#allocation7]
        $region16: #{tpu_custom_call.1} parent=11 // pred_fallthru
          _
        // Predicated region
        $region17: #{tpu_custom_call.1} parent=11 // pred_check
          %p332 = pneg %p127
        $region18: #{tpu_custom_call.1} parent=11 // pred_check_branch
          %334 = sbr.rel (%p332) target = $region20
        $region19: #{tpu_custom_call.1} parent=11 // pred_region
          %336 = vsyncadd [#allocation10], 0
          %s337 = sshll.u32 %s3, 4
          %s338 = int_to_ptr.hbm [resolvable:$true] %s337
          %s339 = sshll.u32 [#allocation9], 4
          %s340 = int_to_ptr.vmem [resolvable:$true] %s339
          %345 = dma.hbm_to_vmem [thread:$0]  %s338, 1536, %s340, [#allocation10], 192, 192, 12
        $region20: #{tpu_custom_call.1} parent=11 // pred_fallthru
          _
        // Predicated region
        $region21: #{tpu_custom_call.1} parent=11 // pred_check
          %p346 = pneg %p148
        $region22: #{tpu_custom_call.1} parent=11 // pred_check_branch
          %348 = sbr.rel (%p346) target = $region24
        $region23: #{tpu_custom_call.1} parent=11 // pred_region
          %350 = vsyncadd [#allocation10], 0
          %s351 = sshll.u32 %s4, 4
          %s352 = int_to_ptr.hbm [resolvable:$true] %s351
          %s353 = sshll.u32 [#allocation11], 4
          %s354 = int_to_ptr.vmem [resolvable:$true] %s353
          %359 = dma.hbm_to_vmem [thread:$0]  %s352, 1536, %s354, [#allocation10], 192, 192, 12
        $region24: #{tpu_custom_call.1} parent=11 // pred_fallthru
          _
        // Predicated region
        $region25: #{tpu_custom_call.1} parent=11 // pred_check
          %p360 = pneg %p169
        $region26: #{tpu_custom_call.1} parent=11 // pred_check_branch
          %362 = sbr.rel (%p360) target = $region28
        $region27: #{tpu_custom_call.1} parent=11 // pred_region
          _
        $region28: #{tpu_custom_call.1} parent=11 // pred_fallthru
          _
        // Predicated region
        $region29: #{tpu_custom_call.1} parent=11 // pred_check
          %p363 = pneg %p190
        $region30: #{tpu_custom_call.1} parent=11 // pred_check_branch
          %365 = sbr.rel (%p363) target = $region32
        $region31: #{tpu_custom_call.1} parent=11 // pred_region
          %367 = vsyncadd [#allocation13], 0
          %s369 = sshll.u32 %s6, 4
          %s370 = int_to_ptr.hbm [resolvable:$true] %s369
          %s371 = sshll.u32 [#allocation12], 4
          %s372 = int_to_ptr.vmem [resolvable:$true] %s371
          %374 = dma.hbm_to_vmem [thread:$0]  %s370, 48, %s372, [#allocation13]
        $region32: #{tpu_custom_call.1} parent=11 // pred_fallthru
          _
        // Predicated region
        $region33: #{tpu_custom_call.1} parent=11 // pred_check
          %p375 = pneg %p211
        $region34: #{tpu_custom_call.1} parent=11 // pred_check_branch
          %377 = sbr.rel (%p375) target = $region36
        $region35: #{tpu_custom_call.1} parent=11 // pred_region
          %379 = vsyncadd [#allocation13], 0
          %s380 = sshll.u32 %s7, 4
          %s381 = int_to_ptr.hbm [resolvable:$true] %s380
          %s382 = sshll.u32 [#allocation14], 4
          %s383 = int_to_ptr.vmem [resolvable:$true] %s382
          %388 = dma.hbm_to_vmem [thread:$0]  %s381, 512, %s383, [#allocation13], 64, 64, 4
        $region36: #{tpu_custom_call.1} parent=11 // pred_fallthru
          _
        // Predicated region
        $region37: #{tpu_custom_call.1} parent=11 // pred_check
          %p389 = pneg %p232
        $region38: #{tpu_custom_call.1} parent=11 // pred_check_branch
          %391 = sbr.rel (%p389) target = $region40
        $region39: #{tpu_custom_call.1} parent=11 // pred_region
          %393 = vsyncadd [#allocation16], 0
          %s394 = sshll.u32 %s8, 4
          %s395 = int_to_ptr.hbm [resolvable:$true] %s394
          %s396 = sshll.u32 [#allocation15], 4
          %s397 = int_to_ptr.vmem [resolvable:$true] %s396
          %402 = dma.hbm_to_vmem [thread:$0]  %s395, 896, %s397, [#allocation16], 64, 64, 4
        $region40: #{tpu_custom_call.1} parent=11 // pred_fallthru
          _
        // Predicated region
        $region41: #{tpu_custom_call.1} parent=11 // pred_check
          %p403 = pneg %p253
        $region42: #{tpu_custom_call.1} parent=11 // pred_check_branch
          %405 = sbr.rel (%p403) target = $region44
        $region43: #{tpu_custom_call.1} parent=11 // pred_region
          _
        $region44: #{tpu_custom_call.1} parent=11 // pred_fallthru
          _
      $region12: #{tpu_custom_call.1} parent=5 // pred_fallthru
        _
      %p406 = scmp.lt.s32.totalorder %s33, 4
      // Predicated region
      $region45: #{tpu_custom_call.1} parent=5 // pred_check
        %p407 = pneg %p406
      $region46: #{tpu_custom_call.1} parent=5 // pred_check_branch
        %409 = sbr.rel (%p407) target = $region48
      $region47: #{tpu_custom_call.1} parent=5 // pred_region
        // Predicated region
        $region49: #{tpu_custom_call.1} parent=47 // pred_check
          %p410 = pneg %p53
        $region50: #{tpu_custom_call.1} parent=47 // pred_check_branch
          %412 = sbr.rel (%p410) target = $region52
        $region51: #{tpu_custom_call.1} parent=47 // pred_region
          %s413 = sand.u32 %s43, 1
          %s414 = scalar_lea.sflag [#allocation4], %s413
          %s415 = sand.u32 %s43, 1
          %s416 = smul.addr %s415, 8
          %s417 = scalar_lea.vmem [#allocation3], %s416
          %419 = vsyncadd %s414, 0
          %s420 = smul.addr %s33, 8
          %s421 = scalar_lea.hbm %s0, %s420
          %s423 = sshll.u32 %s421, 4
          %s424 = int_to_ptr.hbm [resolvable:$true] %s423
          %s425 = sshll.u32 %s417, 4
          %s426 = int_to_ptr.vmem [resolvable:$true] %s425
          %428 = dma.hbm_to_vmem [thread:$0]  %s424, 128, %s426, %s414
        $region52: #{tpu_custom_call.1} parent=47 // pred_fallthru
          _
        // Predicated region
        $region53: #{tpu_custom_call.1} parent=47 // pred_check
          %p429 = pneg %p79
        $region54: #{tpu_custom_call.1} parent=47 // pred_check_branch
          %431 = sbr.rel (%p429) target = $region56
        $region55: #{tpu_custom_call.1} parent=47 // pred_region
          %s432 = sand.u32 %s33, 1
          %s433 = scalar_lea.sflag [#allocation7], %s432
          %s434 = sand.u32 %s69, 1
          %s435 = smul.addr %s434, 8
          %s436 = scalar_lea.vmem [#allocation6], %s435
          %438 = vsyncadd %s433, 0
          %s439 = smul.addr %s33, 8
          %s440 = scalar_lea.hbm %s1, %s439
          %s442 = sshll.u32 %s440, 4
          %s443 = int_to_ptr.hbm [resolvable:$true] %s442
          %s444 = sshll.u32 %s436, 4
          %s445 = int_to_ptr.vmem [resolvable:$true] %s444
          %447 = dma.hbm_to_vmem [thread:$0]  %s443, 128, %s445, %s433
        $region56: #{tpu_custom_call.1} parent=47 // pred_fallthru
          _
      $region48: #{tpu_custom_call.1} parent=5 // pred_fallthru
        _
      %p448 = scmp.le.s32.totalorder 1, %s33
      %p449 = scmp.lt.s32.totalorder %s33, 5
      %p450 = pnand %p448, %p449
      %p451 = pneg %p450
      // Predicated region
      $region57: #{tpu_custom_call.1} parent=5 // pred_check
        _
      $region58: #{tpu_custom_call.1} parent=5 // pred_check_branch
        %453 = sbr.rel (%p450) target = $region60
      $region59: #{tpu_custom_call.1} parent=5 // pred_region
        %s454 = ssub.s32 %s33, 1
        %s455 = sand.u32 %s46, 1
        %s456 = scalar_lea.sflag [#allocation4], %s455
        %s457 = sand.u32 %s46, 1
        %s458 = smul.addr %s457, 8
        %s459 = scalar_lea.vmem [#allocation3], %s458
        // Predicated region
        $region61: #{tpu_custom_call.1} parent=59 // pred_check
          %p460 = pneg %p59
        $region62: #{tpu_custom_call.1} parent=59 // pred_check_branch
          %462 = sbr.rel (%p460) target = $region64
        $region63: #{tpu_custom_call.1} parent=59 // pred_region
          %464 = dma.done %s456, 128
        $region64: #{tpu_custom_call.1} parent=59 // pred_fallthru
          _
        %s465 = sand.u32 %s38, 1
        %s466 = scalar_lea.sflag [#allocation7], %s465
        %s467 = sand.u32 %s72, 1
        %s468 = smul.addr %s467, 8
        %s469 = scalar_lea.vmem [#allocation6], %s468
        // Predicated region
        $region65: #{tpu_custom_call.1} parent=59 // pred_check
          %p470 = pneg %p85
        $region66: #{tpu_custom_call.1} parent=59 // pred_check_branch
          %472 = sbr.rel (%p470) target = $region68
        $region67: #{tpu_custom_call.1} parent=59 // pred_region
          %474 = dma.done %s466, 128
        $region68: #{tpu_custom_call.1} parent=59 // pred_fallthru
          _
        // Predicated region
        $region69: #{tpu_custom_call.1} parent=59 // pred_check
          %p475 = pneg %p106
        $region70: #{tpu_custom_call.1} parent=59 // pred_check_branch
          %477 = sbr.rel (%p475) target = $region72
        $region71: #{tpu_custom_call.1} parent=59 // pred_region
          %479 = dma.done [#allocation7], 128
        $region72: #{tpu_custom_call.1} parent=59 // pred_fallthru
          _
        // Predicated region
        $region73: #{tpu_custom_call.1} parent=59 // pred_check
          %p480 = pneg %p127
        $region74: #{tpu_custom_call.1} parent=59 // pred_check_branch
          %482 = sbr.rel (%p480) target = $region76
        $region75: #{tpu_custom_call.1} parent=59 // pred_region
          %484 = dma.done [#allocation10], 1536
        $region76: #{tpu_custom_call.1} parent=59 // pred_fallthru
          _
        // Predicated region
        $region77: #{tpu_custom_call.1} parent=59 // pred_check
          %p485 = pneg %p148
        $region78: #{tpu_custom_call.1} parent=59 // pred_check_branch
          %487 = sbr.rel (%p485) target = $region80
        $region79: #{tpu_custom_call.1} parent=59 // pred_region
          %489 = dma.done [#allocation10], 1536
        $region80: #{tpu_custom_call.1} parent=59 // pred_fallthru
          _
        // Predicated region
        $region81: #{tpu_custom_call.1} parent=59 // pred_check
          %p490 = pneg %p190
        $region82: #{tpu_custom_call.1} parent=59 // pred_check_branch
          %492 = sbr.rel (%p490) target = $region84
        $region83: #{tpu_custom_call.1} parent=59 // pred_region
          %494 = dma.done [#allocation13], 48
        $region84: #{tpu_custom_call.1} parent=59 // pred_fallthru
          _
        // Predicated region
        $region85: #{tpu_custom_call.1} parent=59 // pred_check
          %p495 = pneg %p211
        $region86: #{tpu_custom_call.1} parent=59 // pred_check_branch
          %497 = sbr.rel (%p495) target = $region88
        $region87: #{tpu_custom_call.1} parent=59 // pred_region
          %499 = dma.done [#allocation13], 512
        $region88: #{tpu_custom_call.1} parent=59 // pred_fallthru
          _
        // Predicated region
        $region89: #{tpu_custom_call.1} parent=59 // pred_check
          %p500 = pneg %p232
        $region90: #{tpu_custom_call.1} parent=59 // pred_check_branch
          %502 = sbr.rel (%p500) target = $region92
        $region91: #{tpu_custom_call.1} parent=59 // pred_region
          %504 = dma.done [#allocation16], 896
        $region92: #{tpu_custom_call.1} parent=59 // pred_fallthru
          _
        %s505 = sand.u32 %s46, 1
        %s506 = scalar_lea.sflag [#allocation4], %s505
        %s507 = sand.u32 %s46, 1
        %s508 = smul.addr %s507, 8
        %s509 = scalar_lea.vmem [#allocation3], %s508
        %p510 = pneg %p59
        %p511 = pneg %p56
        %s512 = sand.u32 %s38, 1
        %s513 = scalar_lea.sflag [#allocation7], %s512
        %s514 = sand.u32 %s72, 1
        %s515 = smul.addr %s514, 8
        %s516 = scalar_lea.vmem [#allocation6], %s515
        %p517 = pneg %p85
        %p518 = pneg %p82
        %p519 = pneg %p106
        %p520 = pneg %p103
        %p521 = pneg %p127
        %p522 = pneg %p124
        %p523 = pneg %p148
        %p524 = pneg %p145
        %p525 = pneg %p169
        %p526 = pneg %p166
        %p527 = pneg %p190
        %p528 = pneg %p187
        %p529 = pneg %p211
        %p530 = pneg %p208
        %p531 = pneg %p232
        %p532 = pneg %p229
        %p533 = pneg %p253
        %p534 = pneg %p250
        %p535 = pneg %p279
        %p536 = pneg %p276
        %s537 = sand.u32 %s266, 1
        %s538 = scalar_lea.sflag [#allocation5], %s537
        %s539 = sand.u32 %s266, 1
        %s540 = smul.addr %s539, 8
        %s541 = scalar_lea.vmem [#allocation17], %s540
        %p542 = pneg %p305
        %p543 = pneg %p302
        %s544 = sand.u32 %s292, 1
        %s545 = scalar_lea.sflag [#allocation19], %s544
        %s546 = sand.u32 %s292, 1
        %s547 = smul.addr %s546, 8
        %s548 = scalar_lea.vmem [#allocation18], %s547
        %p550 = scmp.eq.s32.totalorder %s38, 0
        // Predicated region
        $region93: #{tpu_custom_call.1} parent=59 // pred_check
          %p551 = pneg %p550
        $region94: #{tpu_custom_call.1} parent=59 // pred_check_branch
          %553 = sbr.rel (%p551) target = $region96
        $region95: #{tpu_custom_call.1} parent=59 // pred_region
          %v554 = vld [vmem:[#allocation8] sm:$0xff]
          %vm555 = vcmask 523264
          %556 = vst.msk [vmem:[#allocation2] sm:$0xff] %vm555, %v554
        $region96: #{tpu_custom_call.1} parent=59 // pred_fallthru
          _
        %v557 = vld [vmem:[#allocation2] sm:$0xff]
        %v558 = vld [vmem:[%s459] sm:$0xff]
        %v559 = vpack.c.bf16 %v558, %v558
        %v560 = vld [vmem:[#allocation9] sm:$0xff]
        %v561 = vld [vmem:[#allocation9 + $0x8] sm:$0xf]
        %v562 = vld [vmem:[#allocation9 + $0xc] sm:$0xff]
        %v563 = vld [vmem:[#allocation9 + $0x14] sm:$0xf]
        %v564 = vld [vmem:[#allocation9 + $0x18] sm:$0xff]
        %v565 = vld [vmem:[#allocation9 + $0x20] sm:$0xf]
        %v566 = vld [vmem:[#allocation9 + $0x24] sm:$0xff]
        %v567 = vld [vmem:[#allocation9 + $0x2c] sm:$0xf]
        %v568 = vld [vmem:[#allocation9 + $0x30] sm:$0xff]
        %v569 = vld [vmem:[#allocation9 + $0x38] sm:$0xf]
        %v570 = vld [vmem:[#allocation9 + $0x3c] sm:$0xff]
        %v571 = vld [vmem:[#allocation9 + $0x44] sm:$0xf]
        %v572 = vld [vmem:[#allocation9 + $0x48] sm:$0xff]
        %v573 = vld [vmem:[#allocation9 + $0x50] sm:$0xf]
        %v574 = vld [vmem:[#allocation9 + $0x54] sm:$0xff]
        %v575 = vld [vmem:[#allocation9 + $0x5c] sm:$0xf]
        %v576 = vld [vmem:[%s5] sm:$0x7]
        %v578 = vperm.slane %v576, 0
        %v579 = vperm.slane %v576, 1
        %v580 = vperm.slane %v576, 2
        %v600 = vunpack.c.l.b16 %v560
        %v601 = vunpack.c.h.b16 %v560
        %v602 = vunpack.c.l.b16 %v561
        %v603 = vunpack.c.l.b16 %v562
        %v604 = vunpack.c.h.b16 %v562
        %v605 = vunpack.c.l.b16 %v563
        %v606 = vunpack.c.l.b16 %v564
        %v607 = vunpack.c.h.b16 %v564
        %v608 = vunpack.c.l.b16 %v565
        %v609 = vunpack.c.l.b16 %v566
        %v610 = vunpack.c.h.b16 %v566
        %v611 = vunpack.c.l.b16 %v567
        %v612 = vunpack.c.l.b16 %v568
        %v613 = vunpack.c.h.b16 %v568
        %v614 = vunpack.c.l.b16 %v569
        %v615 = vunpack.c.l.b16 %v570
        %v616 = vunpack.c.h.b16 %v570
        %v617 = vunpack.c.l.b16 %v571
        %v618 = vunpack.c.l.b16 %v572
        %v619 = vunpack.c.h.b16 %v572
        %v620 = vunpack.c.l.b16 %v573
        %v621 = vunpack.c.l.b16 %v574
        %v622 = vunpack.c.h.b16 %v574
        %v623 = vunpack.c.l.b16 %v575
        %v624 = vpack.c.b16 %v603, %v600
        %v625 = vpack.c.b16 %v604, %v601
        %v626 = vpack.c.b16 %v605, %v602
        %v627 = vpack.c.b16 %v609, %v606
        %v628 = vpack.c.b16 %v610, %v607
        %v629 = vpack.c.b16 %v611, %v608
        %v630 = vpack.c.b16 %v615, %v612
        %v631 = vpack.c.b16 %v616, %v613
        %v632 = vpack.c.b16 %v617, %v614
        %v633 = vpack.c.b16 %v621, %v618
        %v634 = vpack.c.b16 %v622, %v619
        %v635 = vpack.c.b16 %v623, %v620
        %vm648 = vcmask 523264
        %v650 = vsel %vm648, %v559, 0
        %652 = vmatpush.bf16.msra.mxu0 0
        %653 = vmatpush.bf16.msra.mxu0 0
        %654 = vmatpush.bf16.msra.mxu0 0
        %655 = vmatpush.bf16.msra.mxu0 0
        %656 = vmatpush.bf16.msra.mxu0 %v633
        %657 = vmatpush.bf16.msra.mxu0 %v630
        %658 = vmatpush.bf16.msra.mxu0 %v627
        %659 = vmatpush.bf16.msra.mxu0 %v624
        %660 = vmatmul.bf16.gmra.mxu0 %v650
        %v661 = vpop.f32.mrf.mxu0
        %v662 = vadd.f32 %v578, %v661
        %v663 = vpop.f32.mrf.mxu0
        %664 = vdwg.mxu0
        %665 = vmatpush.bf16.msra.mxu0 0
        %666 = vmatpush.bf16.msra.mxu0 0
        %667 = vmatpush.bf16.msra.mxu0 0
        %668 = vmatpush.bf16.msra.mxu0 0
        %669 = vmatpush.bf16.msra.mxu0 %v634
        %670 = vmatpush.bf16.msra.mxu0 %v631
        %671 = vmatpush.bf16.msra.mxu0 %v628
        %672 = vmatpush.bf16.msra.mxu0 %v625
        %673 = vmatmul.bf16.gmra.mxu0 %v650
        %v674 = vpop.f32.mrf.mxu0
        %v675 = vadd.f32 %v579, %v674
        %v676 = vpop.f32.mrf.mxu0
        %677 = vdwg.mxu0
        %678 = vmatpush.bf16.msra.mxu0 0
        %679 = vmatpush.bf16.msra.mxu0 0
        %680 = vmatpush.bf16.msra.mxu0 0
        %681 = vmatpush.bf16.msra.mxu0 0
        %682 = vmatpush.bf16.msra.mxu0 %v635
        %683 = vmatpush.bf16.msra.mxu0 %v632
        %684 = vmatpush.bf16.msra.mxu0 %v629
        %685 = vmatpush.bf16.msra.mxu0 %v626
        %686 = vmatmul.bf16.gmra.mxu0 %v650
        %v687 = vpop.f32.mrf.mxu0
        %v688 = vadd.f32 %v580, %v687
        %v689 = vpop.f32.mrf.mxu0
        %690 = vdwg.mxu0
        %v691 = vpack.c.bf16 %v557, %v557
        %v692 = vld [vmem:[#allocation11] sm:$0xff]
        %v693 = vld [vmem:[#allocation11 + $0x8] sm:$0xf]
        %v694 = vld [vmem:[#allocation11 + $0xc] sm:$0xff]
        %v695 = vld [vmem:[#allocation11 + $0x14] sm:$0xf]
        %v696 = vld [vmem:[#allocation11 + $0x18] sm:$0xff]
        %v697 = vld [vmem:[#allocation11 + $0x20] sm:$0xf]
        %v698 = vld [vmem:[#allocation11 + $0x24] sm:$0xff]
        %v699 = vld [vmem:[#allocation11 + $0x2c] sm:$0xf]
        %v700 = vld [vmem:[#allocation11 + $0x30] sm:$0xff]
        %v701 = vld [vmem:[#allocation11 + $0x38] sm:$0xf]
        %v702 = vld [vmem:[#allocation11 + $0x3c] sm:$0xff]
        %v703 = vld [vmem:[#allocation11 + $0x44] sm:$0xf]
        %v704 = vld [vmem:[#allocation11 + $0x48] sm:$0xff]
        %v705 = vld [vmem:[#allocation11 + $0x50] sm:$0xf]
        %v706 = vld [vmem:[#allocation11 + $0x54] sm:$0xff]
        %v707 = vld [vmem:[#allocation11 + $0x5c] sm:$0xf]
        %v708 = vld [vmem:[#allocation12] sm:$0x7]
        %v710 = vperm.slane %v708, 0
        %v711 = vperm.slane %v708, 1
        %v712 = vperm.slane %v708, 2
        %v732 = vunpack.c.l.b16 %v692
        %v733 = vunpack.c.h.b16 %v692
        %v734 = vunpack.c.l.b16 %v693
        %v735 = vunpack.c.l.b16 %v694
        %v736 = vunpack.c.h.b16 %v694
        %v737 = vunpack.c.l.b16 %v695
        %v738 = vunpack.c.l.b16 %v696
        %v739 = vunpack.c.h.b16 %v696
        %v740 = vunpack.c.l.b16 %v697
        %v741 = vunpack.c.l.b16 %v698
        %v742 = vunpack.c.h.b16 %v698
        %v743 = vunpack.c.l.b16 %v699
        %v744 = vunpack.c.l.b16 %v700
        %v745 = vunpack.c.h.b16 %v700
        %v746 = vunpack.c.l.b16 %v701
        %v747 = vunpack.c.l.b16 %v702
        %v748 = vunpack.c.h.b16 %v702
        %v749 = vunpack.c.l.b16 %v703
        %v750 = vunpack.c.l.b16 %v704
        %v751 = vunpack.c.h.b16 %v704
        %v752 = vunpack.c.l.b16 %v705
        %v753 = vunpack.c.l.b16 %v706
        %v754 = vunpack.c.h.b16 %v706
        %v755 = vunpack.c.l.b16 %v707
        %v756 = vpack.c.b16 %v735, %v732
        %v757 = vpack.c.b16 %v736, %v733
        %v758 = vpack.c.b16 %v737, %v734
        %v759 = vpack.c.b16 %v741, %v738
        %v760 = vpack.c.b16 %v742, %v739
        %v761 = vpack.c.b16 %v743, %v740
        %v762 = vpack.c.b16 %v747, %v744
        %v763 = vpack.c.b16 %v748, %v745
        %v764 = vpack.c.b16 %v749, %v746
        %v765 = vpack.c.b16 %v753, %v750
        %v766 = vpack.c.b16 %v754, %v751
        %v767 = vpack.c.b16 %v755, %v752
        %v781 = vsel %vm648, %v691, 0
        %783 = vmatpush.bf16.msra.mxu0 0
        %784 = vmatpush.bf16.msra.mxu0 0
        %785 = vmatpush.bf16.msra.mxu0 0
        %786 = vmatpush.bf16.msra.mxu0 0
        %787 = vmatpush.bf16.msra.mxu0 %v765
        %788 = vmatpush.bf16.msra.mxu0 %v762
        %789 = vmatpush.bf16.msra.mxu0 %v759
        %790 = vmatpush.bf16.msra.mxu0 %v756
        %791 = vmatmul.bf16.gmra.mxu0 %v781
        %v792 = vpop.f32.mrf.mxu0
        %v793 = vadd.f32 %v710, %v792
        %v794 = vpop.f32.mrf.mxu0
        %795 = vdwg.mxu0
        %796 = vmatpush.bf16.msra.mxu0 0
        %797 = vmatpush.bf16.msra.mxu0 0
        %798 = vmatpush.bf16.msra.mxu0 0
        %799 = vmatpush.bf16.msra.mxu0 0
        %800 = vmatpush.bf16.msra.mxu0 %v766
        %801 = vmatpush.bf16.msra.mxu0 %v763
        %802 = vmatpush.bf16.msra.mxu0 %v760
        %803 = vmatpush.bf16.msra.mxu0 %v757
        %804 = vmatmul.bf16.gmra.mxu0 %v781
        %v805 = vpop.f32.mrf.mxu0
        %v806 = vadd.f32 %v711, %v805
        %v807 = vpop.f32.mrf.mxu0
        %808 = vdwg.mxu0
        %809 = vmatpush.bf16.msra.mxu0 0
        %810 = vmatpush.bf16.msra.mxu0 0
        %811 = vmatpush.bf16.msra.mxu0 0
        %812 = vmatpush.bf16.msra.mxu0 0
        %813 = vmatpush.bf16.msra.mxu0 %v767
        %814 = vmatpush.bf16.msra.mxu0 %v764
        %815 = vmatpush.bf16.msra.mxu0 %v761
        %816 = vmatpush.bf16.msra.mxu0 %v758
        %817 = vmatmul.bf16.gmra.mxu0 %v781
        %v818 = vpop.f32.mrf.mxu0
        %v819 = vadd.f32 %v712, %v818
        %v820 = vpop.f32.mrf.mxu0
        %821 = vdwg.mxu0
        %v822 = vadd.f32 %v662, %v793
        %v823 = vxor.u32 %v822, 2147483648
        %v824 = vmul.f32 %v823, 1.442695
        %v825 = vpow.pop %v824
        %v826 = vadd.f32 %v825, 1.0
        %v827 = vrcp.pop %v826
        %v828 = vmul.f32 %v826, %v827
        %v829 = vsub.f32 1.0, %v828
        %v830 = vmul.f32 %v827, %v829
        %v831 = vadd.f32 %v827, %v830
        %vm832 = vweird.f32 %v826
        %vm833 = vweird.f32 %v827
        %vm834 = vmor %vm832, %vm833
        %v835 = vsel %vm834, %v827, %v831
        %v836 = vand.u32 2147483647, %v826
        %vm837 = vcmp.eq.f32.partialorder %v836, 8.507059e+37
        %v838 = vand.u32 %v826, 2147483648
        %v839 = vor.u32 1.1754944e-38, %v838
        %v840 = vsel %vm837, %v839, %v835
        %v841 = vmul.f32 1.0, %v840
        %v842 = vadd.f32 %v675, %v806
        %v843 = vxor.u32 %v842, 2147483648
        %v844 = vmul.f32 %v843, 1.442695
        %v845 = vpow.pop %v844
        %v846 = vadd.f32 %v845, 1.0
        %v847 = vrcp.pop %v846
        %v848 = vmul.f32 %v846, %v847
        %v849 = vsub.f32 1.0, %v848
        %v850 = vmul.f32 %v847, %v849
        %v851 = vadd.f32 %v847, %v850
        %vm852 = vweird.f32 %v846
        %vm853 = vweird.f32 %v847
        %vm854 = vmor %vm852, %vm853
        %v855 = vsel %vm854, %v847, %v851
        %v856 = vand.u32 2147483647, %v846
        %vm857 = vcmp.eq.f32.partialorder %v856, 8.507059e+37
        %v858 = vand.u32 %v846, 2147483648
        %v859 = vor.u32 1.1754944e-38, %v858
        %v860 = vsel %vm857, %v859, %v855
        %v861 = vmul.f32 1.0, %v860
        %v862 = vmul.f32 %v841, %v819
        %v863 = vadd.f32 %v688, %v862
        %v864 = vtanh.pop %v863
        %v865 = vsub.f32 1.0, %v861
        %v866 = vmul.f32 %v865, %v864
        %v867 = vmul.f32 %v861, %v557
        %v868 = vadd.f32 %v866, %v867
        %869 = vst.msk [vmem:[#allocation2] sm:$0xff] %vm648, %v868
        %870 = vst.msk [vmem:[%s541] sm:$0xff] %vm648, %v868
        %v871 = vpack.c.bf16 %v868, %v868
        %v872 = vld [vmem:[#allocation14] sm:$0xf]
        %v873 = vld [vmem:[#allocation14 + $0x4] sm:$0xf]
        %v874 = vld [vmem:[#allocation14 + $0x8] sm:$0xf]
        %v875 = vld [vmem:[#allocation14 + $0xc] sm:$0xf]
        %v876 = vld [vmem:[#allocation14 + $0x10] sm:$0xf]
        %v877 = vld [vmem:[#allocation14 + $0x14] sm:$0xf]
        %v878 = vld [vmem:[#allocation14 + $0x18] sm:$0xf]
        %v879 = vld [vmem:[#allocation14 + $0x1c] sm:$0xf]
        %v880 = vld [vmem:[%s469] sm:$0xff]
        %v881 = vpack.c.bf16 %v880, %v880
        %v882 = vld [vmem:[#allocation15] sm:$0xf]
        %v883 = vld [vmem:[#allocation15 + $0x4] sm:$0xf]
        %v884 = vld [vmem:[#allocation15 + $0x8] sm:$0xf]
        %v885 = vld [vmem:[#allocation15 + $0xc] sm:$0xf]
        %v886 = vld [vmem:[#allocation15 + $0x10] sm:$0xf]
        %v887 = vld [vmem:[#allocation15 + $0x14] sm:$0xf]
        %v888 = vld [vmem:[#allocation15 + $0x18] sm:$0xf]
        %v889 = vld [vmem:[#allocation15 + $0x1c] sm:$0xf]
        %v890 = vld [vmem:[#allocation15 + $0x20] sm:$0xf]
        %v891 = vld [vmem:[#allocation15 + $0x24] sm:$0xf]
        %v892 = vld [vmem:[#allocation15 + $0x28] sm:$0xf]
        %v893 = vld [vmem:[#allocation15 + $0x2c] sm:$0xf]
        %v894 = vld [vmem:[#allocation15 + $0x30] sm:$0xf]
        %v895 = vld [vmem:[#allocation15 + $0x34] sm:$0xf]
        %v910 = vunpack.c.l.b16 %v882
        %v911 = vunpack.c.l.b16 %v883
        %v912 = vunpack.c.l.b16 %v884
        %v913 = vunpack.c.l.b16 %v885
        %v914 = vunpack.c.l.b16 %v886
        %v915 = vunpack.c.l.b16 %v887
        %v916 = vunpack.c.l.b16 %v888
        %v917 = vunpack.c.l.b16 %v889
        %v918 = vunpack.c.l.b16 %v890
        %v919 = vunpack.c.l.b16 %v891
        %v920 = vunpack.c.l.b16 %v892
        %v921 = vunpack.c.l.b16 %v893
        %v922 = vunpack.c.l.b16 %v894
        %v923 = vunpack.c.l.b16 %v895
        %v924 = vpack.c.b16 %v911, %v910
        %v925 = vpack.c.b16 %v913, %v912
        %v926 = vpack.c.b16 %v915, %v914
        %v927 = vpack.c.b16 %v917, %v916
        %v928 = vpack.c.b16 %v919, %v918
        %v929 = vpack.c.b16 %v921, %v920
        %v930 = vpack.c.b16 %v923, %v922
        %vm938 = vcmask 916480
        %v940 = vsel %vm938, %v881, 0
        %942 = vmatpush.bf16.msra.mxu0 0
        %943 = vmatpush.bf16.msra.mxu0 %v930
        %944 = vmatpush.bf16.msra.mxu0 %v929
        %945 = vmatpush.bf16.msra.mxu0 %v928
        %946 = vmatpush.bf16.msra.mxu0 %v927
        %947 = vmatpush.bf16.msra.mxu0 %v926
        %948 = vmatpush.bf16.msra.mxu0 %v925
        %949 = vmatpush.bf16.msra.mxu0 %v924
        %950 = vmatmul.bf16.gmra.mxu0 %v940
        %v951 = vpop.f32.mrf.mxu0
        %v952 = vadd.f32 0.0, %v951
        %v953 = vpop.f32.mrf.mxu0
        %954 = vdwg.mxu0
        %v963 = vunpack.c.l.b16 %v872
        %v964 = vunpack.c.l.b16 %v873
        %v965 = vunpack.c.l.b16 %v874
        %v966 = vunpack.c.l.b16 %v875
        %v967 = vunpack.c.l.b16 %v876
        %v968 = vunpack.c.l.b16 %v877
        %v969 = vunpack.c.l.b16 %v878
        %v970 = vunpack.c.l.b16 %v879
        %v971 = vpack.c.b16 %v964, %v963
        %v972 = vpack.c.b16 %v966, %v965
        %v973 = vpack.c.b16 %v968, %v967
        %v974 = vpack.c.b16 %v970, %v969
        %v980 = vsel %vm648, %v871, 0
        %982 = vmatpush.bf16.msra.mxu0 0
        %983 = vmatpush.bf16.msra.mxu0 0
        %984 = vmatpush.bf16.msra.mxu0 0
        %985 = vmatpush.bf16.msra.mxu0 0
        %986 = vmatpush.bf16.msra.mxu0 %v974
        %987 = vmatpush.bf16.msra.mxu0 %v973
        %988 = vmatpush.bf16.msra.mxu0 %v972
        %989 = vmatpush.bf16.msra.mxu0 %v971
        %990 = vmatmul.bf16.gmra.mxu0 %v980
        %v991 = vpop.f32.mrf.mxu0
        %v992 = vadd.f32 %v952, %v991
        %v993 = vpop.f32.mrf.mxu0
        %994 = vdwg.mxu0
        %v995 = vld [vmem:[%s9] sm:$0x1]
        %v997 = vperm.slane %v995, 0
        %v999 = vadd.f32 %v992, %v997
        %1000 = vst [vmem:[%s548] sm:$0xff] %v999
        %s1001 = sand.u32 %s266, 1
        %s1002 = scalar_lea.sflag [#allocation5], %s1001
        %s1003 = sand.u32 %s266, 1
        %s1004 = smul.addr %s1003, 8
        %s1005 = scalar_lea.vmem [#allocation17], %s1004
        %s1006 = sand.u32 %s292, 1
        %s1007 = scalar_lea.sflag [#allocation19], %s1006
        %s1008 = sand.u32 %s292, 1
        %s1009 = smul.addr %s1008, 8
        %s1010 = scalar_lea.vmem [#allocation18], %s1009
        // Predicated region
        $region97: #{tpu_custom_call.1} parent=59 // pred_check
          %p1011 = pneg %p276
        $region98: #{tpu_custom_call.1} parent=59 // pred_check_branch
          %1013 = sbr.rel (%p1011) target = $region100
        $region99: #{tpu_custom_call.1} parent=59 // pred_region
          %1015 = vsyncadd %s1002, 0
          %s1016 = smul.addr %s38, 8
          %s1017 = scalar_lea.hbm %s10, %s1016
          %s1019 = sshll.u32 %s1005, 4
          %s1020 = int_to_ptr.vmem [resolvable:$true] %s1019
          %s1021 = sshll.u32 %s1017, 4
          %s1022 = int_to_ptr.hbm [resolvable:$true] %s1021
          %1024 = dma.vmem_to_hbm [thread:$0]  %s1020, 128, %s1022, %s1002
        $region100: #{tpu_custom_call.1} parent=59 // pred_fallthru
          _
        // Predicated region
        $region101: #{tpu_custom_call.1} parent=59 // pred_check
          %p1025 = pneg %p302
        $region102: #{tpu_custom_call.1} parent=59 // pred_check_branch
          %1027 = sbr.rel (%p1025) target = $region104
        $region103: #{tpu_custom_call.1} parent=59 // pred_region
          %1029 = vsyncadd %s1007, 0
          %s1030 = smul.addr %s38, 8
          %s1031 = scalar_lea.hbm %s11, %s1030
          %s1033 = sshll.u32 %s1010, 4
          %s1034 = int_to_ptr.vmem [resolvable:$true] %s1033
          %s1035 = sshll.u32 %s1031, 4
          %s1036 = int_to_ptr.hbm [resolvable:$true] %s1035
          %1038 = dma.vmem_to_hbm [thread:$0]  %s1034, 128, %s1036, %s1007
        $region104: #{tpu_custom_call.1} parent=59 // pred_fallthru
          _
      $region60: #{tpu_custom_call.1} parent=5 // pred_fallthru
        _
      %p1039 = scmp.le.s32.totalorder 2, %s33
      // Predicated region
      $region105: #{tpu_custom_call.1} parent=5 // pred_check
        %p1040 = pneg %p1039
      $region106: #{tpu_custom_call.1} parent=5 // pred_check_branch
        %1042 = sbr.rel (%p1040) target = $region108
      $region107: #{tpu_custom_call.1} parent=5 // pred_region
        %s1043 = ssub.s32 %s33, 2
        // Predicated region
        $region109: #{tpu_custom_call.1} parent=107 // pred_check
          %p1044 = pneg %p282
        $region110: #{tpu_custom_call.1} parent=107 // pred_check_branch
          %1046 = sbr.rel (%p1044) target = $region112
        $region111: #{tpu_custom_call.1} parent=107 // pred_region
          %s1047 = sand.u32 %s267, 1
          %s1048 = scalar_lea.sflag [#allocation5], %s1047
          %s1049 = sand.u32 %s267, 1
          %s1050 = smul.addr %s1049, 8
          %s1051 = scalar_lea.vmem [#allocation17], %s1050
          %1053 = dma.done %s1048, 128
        $region112: #{tpu_custom_call.1} parent=107 // pred_fallthru
          _
        // Predicated region
        $region113: #{tpu_custom_call.1} parent=107 // pred_check
          %p1054 = pneg %p308
        $region114: #{tpu_custom_call.1} parent=107 // pred_check_branch
          %1056 = sbr.rel (%p1054) target = $region116
        $region115: #{tpu_custom_call.1} parent=107 // pred_region
          %s1057 = sand.u32 %s293, 1
          %s1058 = scalar_lea.sflag [#allocation19], %s1057
          %s1059 = sand.u32 %s293, 1
          %s1060 = smul.addr %s1059, 8
          %s1061 = scalar_lea.vmem [#allocation18], %s1060
          %1063 = dma.done %s1058, 128
        $region116: #{tpu_custom_call.1} parent=107 // pred_fallthru
          _
      $region108: #{tpu_custom_call.1} parent=5 // pred_fallthru
        _
    $region6: #{tpu_custom_call.1} parent=1 // loop_footer
      %s37 = sadd.s32 1, %s33
    $region7: #{tpu_custom_call.1} parent=1 // loop_footer_branch
      %32 = sbr.rel target = $region3
    $region8: #{tpu_custom_call.1} parent=1 // loop_exit
      _
    %1064 = vsyncpa [#allocation4], 1
    %s1065 = scalar_lea.sflag [#allocation4], 1
    %1066 = vsyncpa %s1065, 1
    %1067 = vsyncpa [#allocation7], 1
    %s1068 = scalar_lea.sflag [#allocation7], 1
    %1069 = vsyncpa %s1068, 1
    %1070 = vsyncpa [#allocation10], 1
    %1071 = vsyncpa [#allocation13], 1
    %1072 = vsyncpa [#allocation16], 1
    %1073 = vsyncpa [#allocation5], 1
    %s1074 = scalar_lea.sflag [#allocation5], 1
    %1075 = vsyncpa %s1074, 1
    %1076 = vsyncpa [#allocation19], 1
    %s1077 = scalar_lea.sflag [#allocation19], 1
    %1078 = vsyncpa %s1077, 1

</llo_original>
